<compile_context>
chip_gen: v5e
topology: v5e:2x2
jax: 0.10.0
libtpu: 0.0.40
codegen_flags: <defaults>
</compile_context>

<pallas_src>
import functools

import jax
import jax.numpy as jnp
import numpy as np
from jax.experimental import pallas as pl
from jax.experimental.pallas import tpu as pltpu

KSIZE = 4
PAD_LO = 1  # floor(1.5)
PAD_HI = 2  # ceil(1.5)
MAX_IMGS_PER_BLOCK = 8  # keeps patch scratch + block-diag weights small (v7x VMEM)


def _resblock_kernel(x_ref, w1_ref, b1_ref, w2_ref, b2_ref, masks_ref,
                     out_ref, patch_ref, *, ksize, width, pad_lo):
    """One block of B images per grid step, sublane-batched (B*C, H*W) layout.

    x_ref    : (R, M)        R = B*C rows (image b, channel c at row b*C+c),
                             M = H*W flattened row-major on lanes
    w*_ref   : (R, K*K*R)    block-diagonal im2col weights
                             col order: tap*(B*C) + b*C + c_in
    b*_ref   : (R, 1)        per-row bias (bias tiled over images)
    masks_ref: (K*K, M)      1.0 where the tap's source pixel lies inside the
                             image (realizes the asymmetric (1,2) zero pad and
                             kills roll wrap-around)
    out_ref  : (R, M)
    patch_ref: (K*K*R, M)    VMEM scratch: transposed im2col patch matrix
    """
    KK = ksize * ksize
    R = x_ref.shape[0]
    M = x_ref.shape[1]

    x = x_ref[...]  # (R, M)

    def build_patches(src):
        # Conv output pixel p (flattened) for tap (ky, kx) reads source pixel
        # p + s with s = (ky-pad)*W + (kx-pad).  pltpu.roll (XLU) supplies the
        # shifted pixels with no slice/reshape relayout; the mask zeroes every
        # destination whose source is outside the image (== zero padding, and
        # also removes circular wrap-around).  Each image owns its own sublane
        # rows, so rolling along lanes never mixes images.
        for tap in range(KK):
            ky, kx = divmod(tap, ksize)
            dy, dx = ky - pad_lo, kx - pad_lo
            s = dy * width + dx
            shift = (-s) % M
            val = pltpu.roll(src, shift, 1) if shift else src
            if dy != 0 or dx != 0:          # center tap: mask is all-ones
                val = val * masks_ref[tap:tap + 1, :]
            # Full 8-sublane, unmasked, tile-aligned store.
            patch_ref[tap * R:(tap + 1) * R, :] = val

    # ---- conv1: single MXU matmul (contraction K*K*B*C) + bias + ReLU ------
    build_patches(x)
    y1 = jnp.dot(w1_ref[...], patch_ref[...],
                 preferred_element_type=jnp.float32)
    y1 = jnp.maximum(y1 + b1_ref[...], 0.0)          # (R, M)

    # ---- conv2: single MXU matmul + bias, then residual add -----------------
    build_patches(y1)
    y2 = jnp.dot(w2_ref[...], patch_ref[...],
                 preferred_element_type=jnp.float32)
    out_ref[...] = (y2 + b2_ref[...] + x).astype(out_ref.dtype)


def _pick_images_per_block(n):
    """Largest divisor of n that is <= MAX_IMGS_PER_BLOCK."""
    for b in range(min(n, MAX_IMGS_PER_BLOCK), 0, -1):
        if n % b == 0:
            return b
    return 1


def _block_diag_weights(w_hwio, n_imgs):
    """HWIO (K,K,Ci,Co) -> block-diagonal (B*Co, K*K*B*Ci) im2col weights."""
    K1, K2, Ci, Co = w_hwio.shape
    wt = jnp.transpose(w_hwio.astype(jnp.float32), (3, 0, 1, 2))  # (Co,K,K,Ci)
    wt = wt.reshape(Co, K1 * K2, Ci)                              # (Co,KK,Ci)
    eye = jnp.eye(n_imgs, dtype=jnp.float32)
    # big[b, co, t, b', ci] = eye[b, b'] * wt[co, t, ci]
    big = jnp.einsum('ab,otc->aotbc', eye, wt)
    return big.reshape(n_imgs * Co, K1 * K2 * n_imgs * Ci)


@jax.jit
def resblock_pallas(x_nchw, w1, b1, w2, b2):
    """x_nchw: (N, C, H, W) float32; weights in HWIO (K, K, Cin, Cout)."""
    x_nchw = x_nchw.astype(jnp.float32)
    N, C, H, W = x_nchw.shape
    K = KSIZE
    M = H * W

    B = _pick_images_per_block(N)   # images per grid step
    R = B * C                       # rows per block (sublane-batched)

    # Free reshape of contiguous NCHW: row b*C+c <-> image b, channel c.
    x_rows = x_nchw.reshape(N * C, M)

    w1big = _block_diag_weights(w1, B)
    w2big = _block_diag_weights(w2, B)
    b1big = jnp.tile(b1.astype(jnp.float32), B).reshape(R, 1)
    b2big = jnp.tile(b2.astype(jnp.float32), B).reshape(R, 1)

    # Per-tap validity masks (static host constants, fetched once).
    yy = np.arange(M, dtype=np.int64) // W
    xx = np.arange(M, dtype=np.int64) % W
    masks_np = np.zeros((K * K, M), np.float32)
    for ky in range(K):
        for kx in range(K):
            sy = yy + ky - PAD_LO
            sx = xx + kx - PAD_LO
            masks_np[ky * K + kx] = ((sy >= 0) & (sy < H) & (sx >= 0) & (sx < W))
    masks = jnp.asarray(masks_np)

    kernel = functools.partial(_resblock_kernel, ksize=K, width=W,
                               pad_lo=PAD_LO)

    out = pl.pallas_call(
        kernel,
        out_shape=jax.ShapeDtypeStruct((N * C, M), jnp.float32),
        grid_spec=pltpu.PrefetchScalarGridSpec(
            num_scalar_prefetch=0,
            grid=(N // B,),
            in_specs=[
                pl.BlockSpec((R, M), lambda g: (g, 0)),
                # Constant index_maps: weights/biases/masks stay resident.
                pl.BlockSpec((R, K * K * R), lambda g: (0, 0)),
                pl.BlockSpec((R, 1), lambda g: (0, 0)),
                pl.BlockSpec((R, K * K * R), lambda g: (0, 0)),
                pl.BlockSpec((R, 1), lambda g: (0, 0)),
                pl.BlockSpec((K * K, M), lambda g: (0, 0)),
            ],
            out_specs=pl.BlockSpec((R, M), lambda g: (g, 0)),
            scratch_shapes=[pltpu.VMEM((K * K * R, M), jnp.float32)],
        ),
        compiler_params=pltpu.CompilerParams(
            dimension_semantics=("parallel",)),
    )(x_rows, w1big, b1big, w2big, b2big, masks)

    return out.reshape(N, C, H, W)


def resblock_reference(x_nchw, w1, b1, w2, b2):
    """Plain-JAX reference matching PyTorch ResBlock semantics."""
    x = jnp.transpose(x_nchw, (0, 2, 3, 1))

    def conv(z, w, b):
        y = jax.lax.conv_general_dilated(
            z, w, window_strides=(1, 1),
            padding=((PAD_LO, PAD_HI), (PAD_LO, PAD_HI)),
            dimension_numbers=("NHWC", "HWIO", "NHWC"))
        return y + b.reshape(1, 1, 1, -1)

    y = jnp.maximum(conv(x, w1, b1), 0.0)
    y = conv(y, w2, b2)
    y = y + x
    return jnp.transpose(y, (0, 3, 1, 2))


if __name__ == "__main__":
    N, C, H, W = 2, 4, 16, 16
    key = jax.random.PRNGKey(0)
    kx_, kw1, kb1, kw2, kb2 = jax.random.split(key, 5)

    x = jax.random.normal(kx_, (N, C, H, W), dtype=jnp.float32)
    # Synthetic Conv2d(C, C, 4) parameters in HWIO layout.
    w1 = jax.random.normal(kw1, (KSIZE, KSIZE, C, C), dtype=jnp.float32) * 0.1
    b1 = jax.random.normal(kb1, (C,), dtype=jnp.float32) * 0.1
    w2 = jax.random.normal(kw2, (KSIZE, KSIZE, C, C), dtype=jnp.float32) * 0.1
    b2 = jax.random.normal(kb2, (C,), dtype=jnp.float32) * 0.1

    out = resblock_pallas(x, w1, b1, w2, b2)
    out = jax.block_until_ready(out)

    ref = resblock_reference(x, w1, b1, w2, b2)
    assert out.shape == (N, C, H, W)
    err = float(jnp.max(jnp.abs(out - ref)))
    assert jnp.allclose(out, ref, rtol=1e-4, atol=2e-4), err

    print("KERNEL_OK")
</pallas_src>

<mosaic_0001>
module attributes {stable_mosaic.version = 11 : i64} {
  func.func @_resblock_kernel(%arg0: i32, %arg1: memref<8x256xf32, #tpu.memory_space<vmem>>, %arg2: memref<8x128xf32, #tpu.memory_space<vmem>>, %arg3: memref<8x1xf32, #tpu.memory_space<vmem>>, %arg4: memref<8x128xf32, #tpu.memory_space<vmem>>, %arg5: memref<8x1xf32, #tpu.memory_space<vmem>>, %arg6: memref<16x256xf32, #tpu.memory_space<vmem>>, %arg7: memref<8x256xf32, #tpu.memory_space<vmem>>, %arg8: memref<128x256xf32, #tpu.memory_space<vmem>>) attributes {dimension_semantics = [#tpu.dimension_semantics<parallel>], iteration_bounds = array<i64: 1>, scalar_prefetch = 0 : i64, scratch_operands = 1 : i64, tpu.core_type = #tpu.core_type<tc>, window_params = [{transform_indices = @transform_0, window_bounds = array<i64: 8, 256>}, {pipeline_mode = #tpu.pipeline_mode<synchronous>, transform_indices = @transform_1, window_bounds = array<i64: 8, 128>}, {pipeline_mode = #tpu.pipeline_mode<synchronous>, transform_indices = @transform_2, window_bounds = array<i64: 8, 1>}, {pipeline_mode = #tpu.pipeline_mode<synchronous>, transform_indices = @transform_3, window_bounds = array<i64: 8, 128>}, {pipeline_mode = #tpu.pipeline_mode<synchronous>, transform_indices = @transform_4, window_bounds = array<i64: 8, 1>}, {pipeline_mode = #tpu.pipeline_mode<synchronous>, transform_indices = @transform_5, window_bounds = array<i64: 16, 256>}, {transform_indices = @transform_6, window_bounds = array<i64: 8, 256>}]} {
    %c0 = arith.constant 0 : index
    %c0_0 = arith.constant 0 : index
    %0 = vector.load %arg1[%c0, %c0_0] : memref<8x256xf32, #tpu.memory_space<vmem>>, vector<8x256xf32>
    %c17_i32 = arith.constant 17 : i32
    %1 = tpu.dynamic_rotate %0 by %c17_i32 dim 1 : vector<8x256xf32>, i32 -> vector<8x256xf32>
    %c0_1 = arith.constant 0 : index
    %c0_2 = arith.constant 0 : index
    %2 = vector.load %arg6[%c0_1, %c0_2] : memref<16x256xf32, #tpu.memory_space<vmem>>, vector<1x256xf32>
    %3 = vector.broadcast %2 : vector<1x256xf32> to vector<8x256xf32>
    %4 = arith.mulf %1, %3 : vector<8x256xf32>
    %c0_3 = arith.constant 0 : index
    %c0_4 = arith.constant 0 : index
    %5 = vector.load %arg8[%c0_3, %c0_4] : memref<128x256xf32, #tpu.memory_space<vmem>>, vector<8x256xf32>
    tpu.vector_store %arg8[%c0_3, %c0_4], %4 {strides = array<i32>} : memref<128x256xf32, #tpu.memory_space<vmem>>, vector<8x256xf32>,
    %c16_i32 = arith.constant 16 : i32
    %6 = tpu.dynamic_rotate %0 by %c16_i32 dim 1 : vector<8x256xf32>, i32 -> vector<8x256xf32>
    %c1 = arith.constant 1 : index
    %c0_5 = arith.constant 0 : index
    %7 = vector.load %arg6[%c1, %c0_5] : memref<16x256xf32, #tpu.memory_space<vmem>>, vector<1x256xf32>
    %8 = vector.broadcast %7 : vector<1x256xf32> to vector<8x256xf32>
    %9 = arith.mulf %6, %8 : vector<8x256xf32>
    %c8 = arith.constant 8 : index
    %c0_6 = arith.constant 0 : index
    %10 = vector.load %arg8[%c8, %c0_6] : memref<128x256xf32, #tpu.memory_space<vmem>>, vector<8x256xf32>
    tpu.vector_store %arg8[%c8, %c0_6], %9 {strides = array<i32>} : memref<128x256xf32, #tpu.memory_space<vmem>>, vector<8x256xf32>,
    %c15_i32 = arith.constant 15 : i32
    %11 = tpu.dynamic_rotate %0 by %c15_i32 dim 1 : vector<8x256xf32>, i32 -> vector<8x256xf32>
    %c2 = arith.constant 2 : index
    %c0_7 = arith.constant 0 : index
    %12 = vector.load %arg6[%c2, %c0_7] : memref<16x256xf32, #tpu.memory_space<vmem>>, vector<1x256xf32>
    %13 = vector.broadcast %12 : vector<1x256xf32> to vector<8x256xf32>
    %14 = arith.mulf %11, %13 : vector<8x256xf32>
    %c16 = arith.constant 16 : index
    %c0_8 = arith.constant 0 : index
    %15 = vector.load %arg8[%c16, %c0_8] : memref<128x256xf32, #tpu.memory_space<vmem>>, vector<8x256xf32>
    tpu.vector_store %arg8[%c16, %c0_8], %14 {strides = array<i32>} : memref<128x256xf32, #tpu.memory_space<vmem>>, vector<8x256xf32>,
    %c14_i32 = arith.constant 14 : i32
    %16 = tpu.dynamic_rotate %0 by %c14_i32 dim 1 : vector<8x256xf32>, i32 -> vector<8x256xf32>
    %c3 = arith.constant 3 : index
    %c0_9 = arith.constant 0 : index
    %17 = vector.load %arg6[%c3, %c0_9] : memref<16x256xf32, #tpu.memory_space<vmem>>, vector<1x256xf32>
    %18 = vector.broadcast %17 : vector<1x256xf32> to vector<8x256xf32>
    %19 = arith.mulf %16, %18 : vector<8x256xf32>
    %c24 = arith.constant 24 : index
    %c0_10 = arith.constant 0 : index
    %20 = vector.load %arg8[%c24, %c0_10] : memref<128x256xf32, #tpu.memory_space<vmem>>, vector<8x256xf32>
    tpu.vector_store %arg8[%c24, %c0_10], %19 {strides = array<i32>} : memref<128x256xf32, #tpu.memory_space<vmem>>, vector<8x256xf32>,
    %c1_i32 = arith.constant 1 : i32
    %21 = tpu.dynamic_rotate %0 by %c1_i32 dim 1 : vector<8x256xf32>, i32 -> vector<8x256xf32>
    %c4 = arith.constant 4 : index
    %c0_11 = arith.constant 0 : index
    %22 = vector.load %arg6[%c4, %c0_11] : memref<16x256xf32, #tpu.memory_space<vmem>>, vector<1x256xf32>
    %23 = vector.broadcast %22 : vector<1x256xf32> to vector<8x256xf32>
    %24 = arith.mulf %21, %23 : vector<8x256xf32>
    %c32 = arith.constant 32 : index
    %c0_12 = arith.constant 0 : index
    %25 = vector.load %arg8[%c32, %c0_12] : memref<128x256xf32, #tpu.memory_space<vmem>>, vector<8x256xf32>
    tpu.vector_store %arg8[%c32, %c0_12], %24 {strides = array<i32>} : memref<128x256xf32, #tpu.memory_space<vmem>>, vector<8x256xf32>,
    %c40 = arith.constant 40 : index
    %c0_13 = arith.constant 0 : index
    %26 = vector.load %arg8[%c40, %c0_13] : memref<128x256xf32, #tpu.memory_space<vmem>>, vector<8x256xf32>
    tpu.vector_store %arg8[%c40, %c0_13], %0 {strides = array<i32>} : memref<128x256xf32, #tpu.memory_space<vmem>>, vector<8x256xf32>,
    %c255_i32 = arith.constant 255 : i32
    %27 = tpu.dynamic_rotate %0 by %c255_i32 dim 1 : vector<8x256xf32>, i32 -> vector<8x256xf32>
    %c6 = arith.constant 6 : index
    %c0_14 = arith.constant 0 : index
    %28 = vector.load %arg6[%c6, %c0_14] : memref<16x256xf32, #tpu.memory_space<vmem>>, vector<1x256xf32>
    %29 = vector.broadcast %28 : vector<1x256xf32> to vector<8x256xf32>
    %30 = arith.mulf %27, %29 : vector<8x256xf32>
    %c48 = arith.constant 48 : index
    %c0_15 = arith.constant 0 : index
    %31 = vector.load %arg8[%c48, %c0_15] : memref<128x256xf32, #tpu.memory_space<vmem>>, vector<8x256xf32>
    tpu.vector_store %arg8[%c48, %c0_15], %30 {strides = array<i32>} : memref<128x256xf32, #tpu.memory_space<vmem>>, vector<8x256xf32>,
    %c254_i32 = arith.constant 254 : i32
    %32 = tpu.dynamic_rotate %0 by %c254_i32 dim 1 : vector<8x256xf32>, i32 -> vector<8x256xf32>
    %c7 = arith.constant 7 : index
    %c0_16 = arith.constant 0 : index
    %33 = vector.load %arg6[%c7, %c0_16] : memref<16x256xf32, #tpu.memory_space<vmem>>, vector<1x256xf32>
    %34 = vector.broadcast %33 : vector<1x256xf32> to vector<8x256xf32>
    %35 = arith.mulf %32, %34 : vector<8x256xf32>
    %c56 = arith.constant 56 : index
    %c0_17 = arith.constant 0 : index
    %36 = vector.load %arg8[%c56, %c0_17] : memref<128x256xf32, #tpu.memory_space<vmem>>, vector<8x256xf32>
    tpu.vector_store %arg8[%c56, %c0_17], %35 {strides = array<i32>} : memref<128x256xf32, #tpu.memory_space<vmem>>, vector<8x256xf32>,
    %c241_i32 = arith.constant 241 : i32
    %37 = tpu.dynamic_rotate %0 by %c241_i32 dim 1 : vector<8x256xf32>, i32 -> vector<8x256xf32>
    %c8_18 = arith.constant 8 : index
    %c0_19 = arith.constant 0 : index
    %38 = vector.load %arg6[%c8_18, %c0_19] : memref<16x256xf32, #tpu.memory_space<vmem>>, vector<1x256xf32>
    %39 = vector.broadcast %38 : vector<1x256xf32> to vector<8x256xf32>
    %40 = arith.mulf %37, %39 : vector<8x256xf32>
    %c64 = arith.constant 64 : index
    %c0_20 = arith.constant 0 : index
    %41 = vector.load %arg8[%c64, %c0_20] : memref<128x256xf32, #tpu.memory_space<vmem>>, vector<8x256xf32>
    tpu.vector_store %arg8[%c64, %c0_20], %40 {strides = array<i32>} : memref<128x256xf32, #tpu.memory_space<vmem>>, vector<8x256xf32>,
    %c240_i32 = arith.constant 240 : i32
    %42 = tpu.dynamic_rotate %0 by %c240_i32 dim 1 : vector<8x256xf32>, i32 -> vector<8x256xf32>
    %c9 = arith.constant 9 : index
    %c0_21 = arith.constant 0 : index
    %43 = vector.load %arg6[%c9, %c0_21] : memref<16x256xf32, #tpu.memory_space<vmem>>, vector<1x256xf32>
    %44 = vector.broadcast %43 : vector<1x256xf32> to vector<8x256xf32>
    %45 = arith.mulf %42, %44 : vector<8x256xf32>
    %c72 = arith.constant 72 : index
    %c0_22 = arith.constant 0 : index
    %46 = vector.load %arg8[%c72, %c0_22] : memref<128x256xf32, #tpu.memory_space<vmem>>, vector<8x256xf32>
    tpu.vector_store %arg8[%c72, %c0_22], %45 {strides = array<i32>} : memref<128x256xf32, #tpu.memory_space<vmem>>, vector<8x256xf32>,
    %c239_i32 = arith.constant 239 : i32
    %47 = tpu.dynamic_rotate %0 by %c239_i32 dim 1 : vector<8x256xf32>, i32 -> vector<8x256xf32>
    %c10 = arith.constant 10 : index
    %c0_23 = arith.constant 0 : index
    %48 = vector.load %arg6[%c10, %c0_23] : memref<16x256xf32, #tpu.memory_space<vmem>>, vector<1x256xf32>
    %49 = vector.broadcast %48 : vector<1x256xf32> to vector<8x256xf32>
    %50 = arith.mulf %47, %49 : vector<8x256xf32>
    %c80 = arith.constant 80 : index
    %c0_24 = arith.constant 0 : index
    %51 = vector.load %arg8[%c80, %c0_24] : memref<128x256xf32, #tpu.memory_space<vmem>>, vector<8x256xf32>
    tpu.vector_store %arg8[%c80, %c0_24], %50 {strides = array<i32>} : memref<128x256xf32, #tpu.memory_space<vmem>>, vector<8x256xf32>,
    %c238_i32 = arith.constant 238 : i32
    %52 = tpu.dynamic_rotate %0 by %c238_i32 dim 1 : vector<8x256xf32>, i32 -> vector<8x256xf32>
    %c11 = arith.constant 11 : index
    %c0_25 = arith.constant 0 : index
    %53 = vector.load %arg6[%c11, %c0_25] : memref<16x256xf32, #tpu.memory_space<vmem>>, vector<1x256xf32>
    %54 = vector.broadcast %53 : vector<1x256xf32> to vector<8x256xf32>
    %55 = arith.mulf %52, %54 : vector<8x256xf32>
    %c88 = arith.constant 88 : index
    %c0_26 = arith.constant 0 : index
    %56 = vector.load %arg8[%c88, %c0_26] : memref<128x256xf32, #tpu.memory_space<vmem>>, vector<8x256xf32>
    tpu.vector_store %arg8[%c88, %c0_26], %55 {strides = array<i32>} : memref<128x256xf32, #tpu.memory_space<vmem>>, vector<8x256xf32>,
    %c225_i32 = arith.constant 225 : i32
    %57 = tpu.dynamic_rotate %0 by %c225_i32 dim 1 : vector<8x256xf32>, i32 -> vector<8x256xf32>
    %c12 = arith.constant 12 : index
    %c0_27 = arith.constant 0 : index
    %58 = vector.load %arg6[%c12, %c0_27] : memref<16x256xf32, #tpu.memory_space<vmem>>, vector<1x256xf32>
    %59 = vector.broadcast %58 : vector<1x256xf32> to vector<8x256xf32>
    %60 = arith.mulf %57, %59 : vector<8x256xf32>
    %c96 = arith.constant 96 : index
    %c0_28 = arith.constant 0 : index
    %61 = vector.load %arg8[%c96, %c0_28] : memref<128x256xf32, #tpu.memory_space<vmem>>, vector<8x256xf32>
    tpu.vector_store %arg8[%c96, %c0_28], %60 {strides = array<i32>} : memref<128x256xf32, #tpu.memory_space<vmem>>, vector<8x256xf32>,
    %c224_i32 = arith.constant 224 : i32
    %62 = tpu.dynamic_rotate %0 by %c224_i32 dim 1 : vector<8x256xf32>, i32 -> vector<8x256xf32>
    %c13 = arith.constant 13 : index
    %c0_29 = arith.constant 0 : index
    %63 = vector.load %arg6[%c13, %c0_29] : memref<16x256xf32, #tpu.memory_space<vmem>>, vector<1x256xf32>
    %64 = vector.broadcast %63 : vector<1x256xf32> to vector<8x256xf32>
    %65 = arith.mulf %62, %64 : vector<8x256xf32>
    %c104 = arith.constant 104 : index
    %c0_30 = arith.constant 0 : index
    %66 = vector.load %arg8[%c104, %c0_30] : memref<128x256xf32, #tpu.memory_space<vmem>>, vector<8x256xf32>
    tpu.vector_store %arg8[%c104, %c0_30], %65 {strides = array<i32>} : memref<128x256xf32, #tpu.memory_space<vmem>>, vector<8x256xf32>,
    %c223_i32 = arith.constant 223 : i32
    %67 = tpu.dynamic_rotate %0 by %c223_i32 dim 1 : vector<8x256xf32>, i32 -> vector<8x256xf32>
    %c14 = arith.constant 14 : index
    %c0_31 = arith.constant 0 : index
    %68 = vector.load %arg6[%c14, %c0_31] : memref<16x256xf32, #tpu.memory_space<vmem>>, vector<1x256xf32>
    %69 = vector.broadcast %68 : vector<1x256xf32> to vector<8x256xf32>
    %70 = arith.mulf %67, %69 : vector<8x256xf32>
    %c112 = arith.constant 112 : index
    %c0_32 = arith.constant 0 : index
    %71 = vector.load %arg8[%c112, %c0_32] : memref<128x256xf32, #tpu.memory_space<vmem>>, vector<8x256xf32>
    tpu.vector_store %arg8[%c112, %c0_32], %70 {strides = array<i32>} : memref<128x256xf32, #tpu.memory_space<vmem>>, vector<8x256xf32>,
    %c222_i32 = arith.constant 222 : i32
    %72 = tpu.dynamic_rotate %0 by %c222_i32 dim 1 : vector<8x256xf32>, i32 -> vector<8x256xf32>
    %c15 = arith.constant 15 : index
    %c0_33 = arith.constant 0 : index
    %73 = vector.load %arg6[%c15, %c0_33] : memref<16x256xf32, #tpu.memory_space<vmem>>, vector<1x256xf32>
    %74 = vector.broadcast %73 : vector<1x256xf32> to vector<8x256xf32>
    %75 = arith.mulf %72, %74 : vector<8x256xf32>
    %c120 = arith.constant 120 : index
    %c0_34 = arith.constant 0 : index
    %76 = vector.load %arg8[%c120, %c0_34] : memref<128x256xf32, #tpu.memory_space<vmem>>, vector<8x256xf32>
    tpu.vector_store %arg8[%c120, %c0_34], %75 {strides = array<i32>} : memref<128x256xf32, #tpu.memory_space<vmem>>, vector<8x256xf32>,
    %c0_35 = arith.constant 0 : index
    %c0_36 = arith.constant 0 : index
    %77 = vector.load %arg2[%c0_35, %c0_36] : memref<8x128xf32, #tpu.memory_space<vmem>>, vector<8x128xf32>
    %c0_37 = arith.constant 0 : index
    %c0_38 = arith.constant 0 : index
    %78 = vector.load %arg8[%c0_37, %c0_38] : memref<128x256xf32, #tpu.memory_space<vmem>>, vector<128x256xf32>
    %cst = arith.constant dense<0.000000e+00> : vector<8x256xf32>
    %79 = tpu.matmul %77, %78, %cst {dimension_numbers = #tpu.dot_dimension_numbers<[1], [0], [0], [1], [0, 0, 1, 1], [], []>} : vector<8x128xf32>, vector<128x256xf32>, vector<8x256xf32> -> vector<8x256xf32>
    %c0_39 = arith.constant 0 : index
    %c0_40 = arith.constant 0 : index
    %80 = vector.load %arg3[%c0_39, %c0_40] : memref<8x1xf32, #tpu.memory_space<vmem>>, vector<8x1xf32>
    %81 = vector.broadcast %80 : vector<8x1xf32> to vector<8x256xf32>
    %82 = arith.addf %79, %81 : vector<8x256xf32>
    %cst_41 = arith.constant 0.000000e+00 : f32
    %83 = vector.broadcast %cst_41 : f32 to vector<8x256xf32>
    %84 = arith.maximumf %82, %83 : vector<8x256xf32>
    %c17_i32_42 = arith.constant 17 : i32
    %85 = tpu.dynamic_rotate %84 by %c17_i32_42 dim 1 : vector<8x256xf32>, i32 -> vector<8x256xf32>
    %c0_43 = arith.constant 0 : index
    %c0_44 = arith.constant 0 : index
    %86 = vector.load %arg6[%c0_43, %c0_44] : memref<16x256xf32, #tpu.memory_space<vmem>>, vector<1x256xf32>
    %87 = vector.broadcast %86 : vector<1x256xf32> to vector<8x256xf32>
    %88 = arith.mulf %85, %87 : vector<8x256xf32>
    %c0_45 = arith.constant 0 : index
    %c0_46 = arith.constant 0 : index
    %89 = vector.load %arg8[%c0_45, %c0_46] : memref<128x256xf32, #tpu.memory_space<vmem>>, vector<8x256xf32>
    tpu.vector_store %arg8[%c0_45, %c0_46], %88 {strides = array<i32>} : memref<128x256xf32, #tpu.memory_space<vmem>>, vector<8x256xf32>,
    %c16_i32_47 = arith.constant 16 : i32
    %90 = tpu.dynamic_rotate %84 by %c16_i32_47 dim 1 : vector<8x256xf32>, i32 -> vector<8x256xf32>
    %c1_48 = arith.constant 1 : index
    %c0_49 = arith.constant 0 : index
    %91 = vector.load %arg6[%c1_48, %c0_49] : memref<16x256xf32, #tpu.memory_space<vmem>>, vector<1x256xf32>
    %92 = vector.broadcast %91 : vector<1x256xf32> to vector<8x256xf32>
    %93 = arith.mulf %90, %92 : vector<8x256xf32>
    %c8_50 = arith.constant 8 : index
    %c0_51 = arith.constant 0 : index
    %94 = vector.load %arg8[%c8_50, %c0_51] : memref<128x256xf32, #tpu.memory_space<vmem>>, vector<8x256xf32>
    tpu.vector_store %arg8[%c8_50, %c0_51], %93 {strides = array<i32>} : memref<128x256xf32, #tpu.memory_space<vmem>>, vector<8x256xf32>,
    %c15_i32_52 = arith.constant 15 : i32
    %95 = tpu.dynamic_rotate %84 by %c15_i32_52 dim 1 : vector<8x256xf32>, i32 -> vector<8x256xf32>
    %c2_53 = arith.constant 2 : index
    %c0_54 = arith.constant 0 : index
    %96 = vector.load %arg6[%c2_53, %c0_54] : memref<16x256xf32, #tpu.memory_space<vmem>>, vector<1x256xf32>
    %97 = vector.broadcast %96 : vector<1x256xf32> to vector<8x256xf32>
    %98 = arith.mulf %95, %97 : vector<8x256xf32>
    %c16_55 = arith.constant 16 : index
    %c0_56 = arith.constant 0 : index
    %99 = vector.load %arg8[%c16_55, %c0_56] : memref<128x256xf32, #tpu.memory_space<vmem>>, vector<8x256xf32>
    tpu.vector_store %arg8[%c16_55, %c0_56], %98 {strides = array<i32>} : memref<128x256xf32, #tpu.memory_space<vmem>>, vector<8x256xf32>,
    %c14_i32_57 = arith.constant 14 : i32
    %100 = tpu.dynamic_rotate %84 by %c14_i32_57 dim 1 : vector<8x256xf32>, i32 -> vector<8x256xf32>
    %c3_58 = arith.constant 3 : index
    %c0_59 = arith.constant 0 : index
    %101 = vector.load %arg6[%c3_58, %c0_59] : memref<16x256xf32, #tpu.memory_space<vmem>>, vector<1x256xf32>
    %102 = vector.broadcast %101 : vector<1x256xf32> to vector<8x256xf32>
    %103 = arith.mulf %100, %102 : vector<8x256xf32>
    %c24_60 = arith.constant 24 : index
    %c0_61 = arith.constant 0 : index
    %104 = vector.load %arg8[%c24_60, %c0_61] : memref<128x256xf32, #tpu.memory_space<vmem>>, vector<8x256xf32>
    tpu.vector_store %arg8[%c24_60, %c0_61], %103 {strides = array<i32>} : memref<128x256xf32, #tpu.memory_space<vmem>>, vector<8x256xf32>,
    %c1_i32_62 = arith.constant 1 : i32
    %105 = tpu.dynamic_rotate %84 by %c1_i32_62 dim 1 : vector<8x256xf32>, i32 -> vector<8x256xf32>
    %c4_63 = arith.constant 4 : index
    %c0_64 = arith.constant 0 : index
    %106 = vector.load %arg6[%c4_63, %c0_64] : memref<16x256xf32, #tpu.memory_space<vmem>>, vector<1x256xf32>
    %107 = vector.broadcast %106 : vector<1x256xf32> to vector<8x256xf32>
    %108 = arith.mulf %105, %107 : vector<8x256xf32>
    %c32_65 = arith.constant 32 : index
    %c0_66 = arith.constant 0 : index
    %109 = vector.load %arg8[%c32_65, %c0_66] : memref<128x256xf32, #tpu.memory_space<vmem>>, vector<8x256xf32>
    tpu.vector_store %arg8[%c32_65, %c0_66], %108 {strides = array<i32>} : memref<128x256xf32, #tpu.memory_space<vmem>>, vector<8x256xf32>,
    %c40_67 = arith.constant 40 : index
    %c0_68 = arith.constant 0 : index
    %110 = vector.load %arg8[%c40_67, %c0_68] : memref<128x256xf32, #tpu.memory_space<vmem>>, vector<8x256xf32>
    tpu.vector_store %arg8[%c40_67, %c0_68], %84 {strides = array<i32>} : memref<128x256xf32, #tpu.memory_space<vmem>>, vector<8x256xf32>,
    %c255_i32_69 = arith.constant 255 : i32
    %111 = tpu.dynamic_rotate %84 by %c255_i32_69 dim 1 : vector<8x256xf32>, i32 -> vector<8x256xf32>
    %c6_70 = arith.constant 6 : index
    %c0_71 = arith.constant 0 : index
    %112 = vector.load %arg6[%c6_70, %c0_71] : memref<16x256xf32, #tpu.memory_space<vmem>>, vector<1x256xf32>
    %113 = vector.broadcast %112 : vector<1x256xf32> to vector<8x256xf32>
    %114 = arith.mulf %111, %113 : vector<8x256xf32>
    %c48_72 = arith.constant 48 : index
    %c0_73 = arith.constant 0 : index
    %115 = vector.load %arg8[%c48_72, %c0_73] : memref<128x256xf32, #tpu.memory_space<vmem>>, vector<8x256xf32>
    tpu.vector_store %arg8[%c48_72, %c0_73], %114 {strides = array<i32>} : memref<128x256xf32, #tpu.memory_space<vmem>>, vector<8x256xf32>,
    %c254_i32_74 = arith.constant 254 : i32
    %116 = tpu.dynamic_rotate %84 by %c254_i32_74 dim 1 : vector<8x256xf32>, i32 -> vector<8x256xf32>
    %c7_75 = arith.constant 7 : index
    %c0_76 = arith.constant 0 : index
    %117 = vector.load %arg6[%c7_75, %c0_76] : memref<16x256xf32, #tpu.memory_space<vmem>>, vector<1x256xf32>
    %118 = vector.broadcast %117 : vector<1x256xf32> to vector<8x256xf32>
    %119 = arith.mulf %116, %118 : vector<8x256xf32>
    %c56_77 = arith.constant 56 : index
    %c0_78 = arith.constant 0 : index
    %120 = vector.load %arg8[%c56_77, %c0_78] : memref<128x256xf32, #tpu.memory_space<vmem>>, vector<8x256xf32>
    tpu.vector_store %arg8[%c56_77, %c0_78], %119 {strides = array<i32>} : memref<128x256xf32, #tpu.memory_space<vmem>>, vector<8x256xf32>,
    %c241_i32_79 = arith.constant 241 : i32
    %121 = tpu.dynamic_rotate %84 by %c241_i32_79 dim 1 : vector<8x256xf32>, i32 -> vector<8x256xf32>
    %c8_80 = arith.constant 8 : index
    %c0_81 = arith.constant 0 : index
    %122 = vector.load %arg6[%c8_80, %c0_81] : memref<16x256xf32, #tpu.memory_space<vmem>>, vector<1x256xf32>
    %123 = vector.broadcast %122 : vector<1x256xf32> to vector<8x256xf32>
    %124 = arith.mulf %121, %123 : vector<8x256xf32>
    %c64_82 = arith.constant 64 : index
    %c0_83 = arith.constant 0 : index
    %125 = vector.load %arg8[%c64_82, %c0_83] : memref<128x256xf32, #tpu.memory_space<vmem>>, vector<8x256xf32>
    tpu.vector_store %arg8[%c64_82, %c0_83], %124 {strides = array<i32>} : memref<128x256xf32, #tpu.memory_space<vmem>>, vector<8x256xf32>,
    %c240_i32_84 = arith.constant 240 : i32
    %126 = tpu.dynamic_rotate %84 by %c240_i32_84 dim 1 : vector<8x256xf32>, i32 -> vector<8x256xf32>
    %c9_85 = arith.constant 9 : index
    %c0_86 = arith.constant 0 : index
    %127 = vector.load %arg6[%c9_85, %c0_86] : memref<16x256xf32, #tpu.memory_space<vmem>>, vector<1x256xf32>
    %128 = vector.broadcast %127 : vector<1x256xf32> to vector<8x256xf32>
    %129 = arith.mulf %126, %128 : vector<8x256xf32>
    %c72_87 = arith.constant 72 : index
    %c0_88 = arith.constant 0 : index
    %130 = vector.load %arg8[%c72_87, %c0_88] : memref<128x256xf32, #tpu.memory_space<vmem>>, vector<8x256xf32>
    tpu.vector_store %arg8[%c72_87, %c0_88], %129 {strides = array<i32>} : memref<128x256xf32, #tpu.memory_space<vmem>>, vector<8x256xf32>,
    %c239_i32_89 = arith.constant 239 : i32
    %131 = tpu.dynamic_rotate %84 by %c239_i32_89 dim 1 : vector<8x256xf32>, i32 -> vector<8x256xf32>
    %c10_90 = arith.constant 10 : index
    %c0_91 = arith.constant 0 : index
    %132 = vector.load %arg6[%c10_90, %c0_91] : memref<16x256xf32, #tpu.memory_space<vmem>>, vector<1x256xf32>
    %133 = vector.broadcast %132 : vector<1x256xf32> to vector<8x256xf32>
    %134 = arith.mulf %131, %133 : vector<8x256xf32>
    %c80_92 = arith.constant 80 : index
    %c0_93 = arith.constant 0 : index
    %135 = vector.load %arg8[%c80_92, %c0_93] : memref<128x256xf32, #tpu.memory_space<vmem>>, vector<8x256xf32>
    tpu.vector_store %arg8[%c80_92, %c0_93], %134 {strides = array<i32>} : memref<128x256xf32, #tpu.memory_space<vmem>>, vector<8x256xf32>,
    %c238_i32_94 = arith.constant 238 : i32
    %136 = tpu.dynamic_rotate %84 by %c238_i32_94 dim 1 : vector<8x256xf32>, i32 -> vector<8x256xf32>
    %c11_95 = arith.constant 11 : index
    %c0_96 = arith.constant 0 : index
    %137 = vector.load %arg6[%c11_95, %c0_96] : memref<16x256xf32, #tpu.memory_space<vmem>>, vector<1x256xf32>
    %138 = vector.broadcast %137 : vector<1x256xf32> to vector<8x256xf32>
    %139 = arith.mulf %136, %138 : vector<8x256xf32>
    %c88_97 = arith.constant 88 : index
    %c0_98 = arith.constant 0 : index
    %140 = vector.load %arg8[%c88_97, %c0_98] : memref<128x256xf32, #tpu.memory_space<vmem>>, vector<8x256xf32>
    tpu.vector_store %arg8[%c88_97, %c0_98], %139 {strides = array<i32>} : memref<128x256xf32, #tpu.memory_space<vmem>>, vector<8x256xf32>,
    %c225_i32_99 = arith.constant 225 : i32
    %141 = tpu.dynamic_rotate %84 by %c225_i32_99 dim 1 : vector<8x256xf32>, i32 -> vector<8x256xf32>
    %c12_100 = arith.constant 12 : index
    %c0_101 = arith.constant 0 : index
    %142 = vector.load %arg6[%c12_100, %c0_101] : memref<16x256xf32, #tpu.memory_space<vmem>>, vector<1x256xf32>
    %143 = vector.broadcast %142 : vector<1x256xf32> to vector<8x256xf32>
    %144 = arith.mulf %141, %143 : vector<8x256xf32>
    %c96_102 = arith.constant 96 : index
    %c0_103 = arith.constant 0 : index
    %145 = vector.load %arg8[%c96_102, %c0_103] : memref<128x256xf32, #tpu.memory_space<vmem>>, vector<8x256xf32>
    tpu.vector_store %arg8[%c96_102, %c0_103], %144 {strides = array<i32>} : memref<128x256xf32, #tpu.memory_space<vmem>>, vector<8x256xf32>,
    %c224_i32_104 = arith.constant 224 : i32
    %146 = tpu.dynamic_rotate %84 by %c224_i32_104 dim 1 : vector<8x256xf32>, i32 -> vector<8x256xf32>
    %c13_105 = arith.constant 13 : index
    %c0_106 = arith.constant 0 : index
    %147 = vector.load %arg6[%c13_105, %c0_106] : memref<16x256xf32, #tpu.memory_space<vmem>>, vector<1x256xf32>
    %148 = vector.broadcast %147 : vector<1x256xf32> to vector<8x256xf32>
    %149 = arith.mulf %146, %148 : vector<8x256xf32>
    %c104_107 = arith.constant 104 : index
    %c0_108 = arith.constant 0 : index
    %150 = vector.load %arg8[%c104_107, %c0_108] : memref<128x256xf32, #tpu.memory_space<vmem>>, vector<8x256xf32>
    tpu.vector_store %arg8[%c104_107, %c0_108], %149 {strides = array<i32>} : memref<128x256xf32, #tpu.memory_space<vmem>>, vector<8x256xf32>,
    %c223_i32_109 = arith.constant 223 : i32
    %151 = tpu.dynamic_rotate %84 by %c223_i32_109 dim 1 : vector<8x256xf32>, i32 -> vector<8x256xf32>
    %c14_110 = arith.constant 14 : index
    %c0_111 = arith.constant 0 : index
    %152 = vector.load %arg6[%c14_110, %c0_111] : memref<16x256xf32, #tpu.memory_space<vmem>>, vector<1x256xf32>
    %153 = vector.broadcast %152 : vector<1x256xf32> to vector<8x256xf32>
    %154 = arith.mulf %151, %153 : vector<8x256xf32>
    %c112_112 = arith.constant 112 : index
    %c0_113 = arith.constant 0 : index
    %155 = vector.load %arg8[%c112_112, %c0_113] : memref<128x256xf32, #tpu.memory_space<vmem>>, vector<8x256xf32>
    tpu.vector_store %arg8[%c112_112, %c0_113], %154 {strides = array<i32>} : memref<128x256xf32, #tpu.memory_space<vmem>>, vector<8x256xf32>,
    %c222_i32_114 = arith.constant 222 : i32
    %156 = tpu.dynamic_rotate %84 by %c222_i32_114 dim 1 : vector<8x256xf32>, i32 -> vector<8x256xf32>
    %c15_115 = arith.constant 15 : index
    %c0_116 = arith.constant 0 : index
    %157 = vector.load %arg6[%c15_115, %c0_116] : memref<16x256xf32, #tpu.memory_space<vmem>>, vector<1x256xf32>
    %158 = vector.broadcast %157 : vector<1x256xf32> to vector<8x256xf32>
    %159 = arith.mulf %156, %158 : vector<8x256xf32>
    %c120_117 = arith.constant 120 : index
    %c0_118 = arith.constant 0 : index
    %160 = vector.load %arg8[%c120_117, %c0_118] : memref<128x256xf32, #tpu.memory_space<vmem>>, vector<8x256xf32>
    tpu.vector_store %arg8[%c120_117, %c0_118], %159 {strides = array<i32>} : memref<128x256xf32, #tpu.memory_space<vmem>>, vector<8x256xf32>,
    %c0_119 = arith.constant 0 : index
    %c0_120 = arith.constant 0 : index
    %161 = vector.load %arg4[%c0_119, %c0_120] : memref<8x128xf32, #tpu.memory_space<vmem>>, vector<8x128xf32>
    %c0_121 = arith.constant 0 : index
    %c0_122 = arith.constant 0 : index
    %162 = vector.load %arg8[%c0_121, %c0_122] : memref<128x256xf32, #tpu.memory_space<vmem>>, vector<128x256xf32>
    %cst_123 = arith.constant dense<0.000000e+00> : vector<8x256xf32>
    %163 = tpu.matmul %161, %162, %cst_123 {dimension_numbers = #tpu.dot_dimension_numbers<[1], [0], [0], [1], [0, 0, 1, 1], [], []>} : vector<8x128xf32>, vector<128x256xf32>, vector<8x256xf32> -> vector<8x256xf32>
    %c0_124 = arith.constant 0 : index
    %c0_125 = arith.constant 0 : index
    %164 = vector.load %arg5[%c0_124, %c0_125] : memref<8x1xf32, #tpu.memory_space<vmem>>, vector<8x1xf32>
    %165 = vector.broadcast %164 : vector<8x1xf32> to vector<8x256xf32>
    %166 = arith.addf %163, %165 : vector<8x256xf32>
    %167 = arith.addf %166, %0 : vector<8x256xf32>
    %c0_126 = arith.constant 0 : index
    %c0_127 = arith.constant 0 : index
    %168 = vector.load %arg7[%c0_126, %c0_127] : memref<8x256xf32, #tpu.memory_space<vmem>>, vector<8x256xf32>
    tpu.vector_store %arg7[%c0_126, %c0_127], %167 {strides = array<i32>} : memref<8x256xf32, #tpu.memory_space<vmem>>, vector<8x256xf32>,
    return
  }
  func.func @transform_0(%arg0: i32) -> (i32, i32) {
    %c0_i32 = arith.constant 0 : i32
    %c0_i32_0 = arith.constant 0 : i32
    return %arg0, %c0_i32 : i32, i32
  }
  func.func @transform_1(%arg0: i32) -> (i32, i32) {
    %c0_i32 = arith.constant 0 : i32
    %c0_i32_0 = arith.constant 0 : i32
    %c0_i32_1 = arith.constant 0 : i32
    return %c0_i32, %c0_i32_0 : i32, i32
  }
  func.func @transform_2(%arg0: i32) -> (i32, i32) {
    %c0_i32 = arith.constant 0 : i32
    %c0_i32_0 = arith.constant 0 : i32
    %c0_i32_1 = arith.constant 0 : i32
    return %c0_i32, %c0_i32_0 : i32, i32
  }
  func.func @transform_3(%arg0: i32) -> (i32, i32) {
    %c0_i32 = arith.constant 0 : i32
    %c0_i32_0 = arith.constant 0 : i32
    %c0_i32_1 = arith.constant 0 : i32
    return %c0_i32, %c0_i32_0 : i32, i32
  }
  func.func @transform_4(%arg0: i32) -> (i32, i32) {
    %c0_i32 = arith.constant 0 : i32
    %c0_i32_0 = arith.constant 0 : i32
    %c0_i32_1 = arith.constant 0 : i32
    return %c0_i32, %c0_i32_0 : i32, i32
  }
  func.func @transform_5(%arg0: i32) -> (i32, i32) {
    %c0_i32 = arith.constant 0 : i32
    %c0_i32_0 = arith.constant 0 : i32
    %c0_i32_1 = arith.constant 0 : i32
    return %c0_i32, %c0_i32_0 : i32, i32
  }
  func.func @transform_6(%arg0: i32) -> (i32, i32) {
    %c0_i32 = arith.constant 0 : i32
    %c0_i32_0 = arith.constant 0 : i32
    return %arg0, %c0_i32 : i32, i32
  }
}

</mosaic_0001>

<llo_original>
// kernel: tile.13
$region0: #{tile.13}
  #allocation0 [shape = 's32[1]{0}', space=sflag, size = 0x4, scoped, tag = 'scoped memory for tile.13']
  %s0 = inlined_call_operand.vmem [shape: f32[4], index: 0, kind: input, shape index: {}]
  %s1 = inlined_call_operand.vmem [shape: f32[2,4], index: 1, kind: output, shape index: {}]
  // Predicated region
  $region2: #{tile.13} parent=0 // pred_check
    _
  $region3: #{tile.13} parent=0 // pred_check_branch
    %3 = sbr.rel (0) target = $region5
  $region4: #{tile.13} parent=0 // pred_region
    _
  $region5: #{tile.13} parent=0 // pred_fallthru
    _
  %v4 = vld [vmem:[%s0] ss:$0 sm:$0xff]
  %5 = vst [vmem:[%s1] sm:$0x3] %v4

// kernel: tile.0
$region0: #{tile.0}
  %s0 = inlined_call_operand.vmem [shape: f32[2,4], index: 0, kind: input, shape index: {}]
  %s1 = inlined_call_operand.vmem [shape: f32[8,1], index: 1, kind: output, shape index: {}]
  $region1: #{tile.0} parent=0
    #allocation0 [shape = 'u8[4096]{0}', space=vmem, size = 0x1000, scoped, tag = 'scoped mem for input reshape']
    %s3 = ssub.s32 4, 1
    %v4 = vld [vmem:[%s0] sm:%s3]
    %5 = vst [vmem:[#allocation0] sm:%s3] %v4
    %v6 = vld [vmem:[#allocation0] sm:$0x3]
    %vm7 = vcmask 7168
    %8 = vst.msk [vmem:[%s1] ss:$4 sm:$0x3] %vm7, %v6
    %v9 = vld [vmem:[#allocation0] sm:$0x3]
    %10 = vrot.lane.b32.xlu0 %v9, 127
    %v11 = vpop.permute.xlu0 %10
    %vm12 = vcmask 7168
    %s13 = scalar_lea.vmem %s1, 1
    %14 = vst.msk [vmem:[%s13] ss:$4 sm:$0x3] %vm12, %v11
    %v15 = vld [vmem:[#allocation0] sm:$0x3]
    %16 = vrot.lane.b32.xlu0 %v15, 126
    %v17 = vpop.permute.xlu0 %16
    %vm18 = vcmask 7168
    %s19 = scalar_lea.vmem %s1, 2
    %20 = vst.msk [vmem:[%s19] ss:$4 sm:$0x3] %vm18, %v17
    %v21 = vld [vmem:[#allocation0] sm:$0x3]
    %22 = vrot.lane.b32.xlu0 %v21, 125
    %v23 = vpop.permute.xlu0 %22
    %vm24 = vcmask 7168
    %s25 = scalar_lea.vmem %s1, 3
    %26 = vst.msk [vmem:[%s25] ss:$4 sm:$0x3] %vm24, %v23

// kernel: resblock_pallas.1
$region0: #{resblock_pallas.1}
  #allocation0 [shape = 'u32[]', space=smem, size = 0x4, offset = 0x4, fixed_abs, tag = 'smem constant byte address 0x4 - core index']
  #allocation1 [shape = 'u32[72,128]{1,0:T(1,128)}', space=vmem, size = 0x9000, scoped, tag = 'internal scratch']
  #allocation2 [shape = 'f32[128,256]{1,0:T(8,128)}', space=vmem, size = 0x20000, scoped, tag = 'scratch operand']
  %s0 = inlined_call_operand.vmem [shape: f32[8,256], index: 0, kind: input, shape index: {}]
  %s1 = inlined_call_operand.vmem [shape: f32[8,128], index: 1, kind: input, shape index: {}]
  %s2 = inlined_call_operand.vmem [shape: f32[8,1], index: 2, kind: input, shape index: {}]
  %s3 = inlined_call_operand.vmem [shape: f32[8,128], index: 3, kind: input, shape index: {}]
  %s4 = inlined_call_operand.vmem [shape: f32[8,1], index: 4, kind: input, shape index: {}]
  %s5 = inlined_call_operand.vmem [shape: f32[16,256], index: 5, kind: input, shape index: {}]
  %s6 = inlined_call_operand.vmem [shape: f32[8,256], index: 6, kind: output, shape index: {}]
  %s7 = sld [smem:[#allocation0]]
  $region34: #{resblock_pallas.1} parent=0
    _
  %s9 = ssub.s32 1, %s7
  %s10 = scalar_select 0, %s9, %s7
  // Predicated region
  $region2: #{resblock_pallas.1} parent=0 // pred_check
    _
  $region3: #{resblock_pallas.1} parent=0 // pred_check_branch
    %12 = sbr.rel (0) target = $region5
  $region4: #{resblock_pallas.1} parent=0 // pred_region
    _
  $region5: #{resblock_pallas.1} parent=0 // pred_fallthru
    _
  // Predicated region
  $region6: #{resblock_pallas.1} parent=0 // pred_check
    _
  $region7: #{resblock_pallas.1} parent=0 // pred_check_branch
    %14 = sbr.rel (0) target = $region9
  $region8: #{resblock_pallas.1} parent=0 // pred_region
    _
  $region9: #{resblock_pallas.1} parent=0 // pred_fallthru
    _
  // Predicated region
  $region10: #{resblock_pallas.1} parent=0 // pred_check
    _
  $region11: #{resblock_pallas.1} parent=0 // pred_check_branch
    %16 = sbr.rel (0) target = $region13
  $region12: #{resblock_pallas.1} parent=0 // pred_region
    _
  $region13: #{resblock_pallas.1} parent=0 // pred_fallthru
    _
  // Predicated region
  $region14: #{resblock_pallas.1} parent=0 // pred_check
    _
  $region15: #{resblock_pallas.1} parent=0 // pred_check_branch
    %18 = sbr.rel (0) target = $region17
  $region16: #{resblock_pallas.1} parent=0 // pred_region
    _
  $region17: #{resblock_pallas.1} parent=0 // pred_fallthru
    _
  // Predicated region
  $region18: #{resblock_pallas.1} parent=0 // pred_check
    _
  $region19: #{resblock_pallas.1} parent=0 // pred_check_branch
    %20 = sbr.rel (0) target = $region21
  $region20: #{resblock_pallas.1} parent=0 // pred_region
    _
  $region21: #{resblock_pallas.1} parent=0 // pred_fallthru
    _
  // Predicated region
  $region22: #{resblock_pallas.1} parent=0 // pred_check
    _
  $region23: #{resblock_pallas.1} parent=0 // pred_check_branch
    %22 = sbr.rel (0) target = $region25
  $region24: #{resblock_pallas.1} parent=0 // pred_region
    _
  $region25: #{resblock_pallas.1} parent=0 // pred_fallthru
    _
  %v23 = vld [vmem:[%s0] sm:$0xff]
  %v24 = vld [vmem:[%s0 + $0x8] sm:$0xff]
  %25 = vrot.lane.b32.xlu0 %v23, 17
  %v26 = vpop.permute.xlu0 %25
  %27 = vrot.lane.b32.xlu0 %v24, 17
  %v28 = vpop.permute.xlu0 %27
  %v29 = vlaneseq
  %v30 = vand.u32 %v29, 127
  %vm31 = vcmp.lt.s32.totalorder %v30, 17
  %v32 = vsel %vm31, %v26, %v28
  %v33 = vsel %vm31, %v28, %v26
  %v34 = vld [vmem:[%s5] ss:$8 sm:$0x3]
  %v36 = vperm.slane %v34, 0
  %v37 = vperm.slane %v34, 1
  %v40 = vmul.f32 %v33, %v36
  %v41 = vmul.f32 %v32, %v37
  %42 = vst [vmem:[#allocation2] sm:$0xff] %v40
  %43 = vst [vmem:[#allocation2 + $0x8] sm:$0xff] %v41
  %44 = vrot.lane.b32.xlu0 %v23, 16
  %v45 = vpop.permute.xlu0 %44
  %46 = vrot.lane.b32.xlu0 %v24, 16
  %v47 = vpop.permute.xlu0 %46
  %vm48 = vcmp.lt.s32.totalorder %v30, 16
  %v49 = vsel %vm48, %v45, %v47
  %v50 = vsel %vm48, %v47, %v45
  %s51 = scalar_lea.vmem %s5, 1
  %v52 = vld [vmem:[%s51] ss:$8 sm:$0x3]
  %v54 = vperm.slane %v52, 0
  %v55 = vperm.slane %v52, 1
  %v58 = vmul.f32 %v50, %v54
  %v59 = vmul.f32 %v49, %v55
  %60 = vst [vmem:[#allocation2 + $0x10] sm:$0xff] %v58
  %61 = vst [vmem:[#allocation2 + $0x18] sm:$0xff] %v59
  %62 = vrot.lane.b32.xlu0 %v23, 15
  %v63 = vpop.permute.xlu0 %62
  %64 = vrot.lane.b32.xlu0 %v24, 15
  %v65 = vpop.permute.xlu0 %64
  %vm66 = vcmp.lt.s32.totalorder %v30, 15
  %v67 = vsel %vm66, %v63, %v65
  %v68 = vsel %vm66, %v65, %v63
  %s69 = scalar_lea.vmem %s5, 2
  %v70 = vld [vmem:[%s69] ss:$8 sm:$0x3]
  %v72 = vperm.slane %v70, 0
  %v73 = vperm.slane %v70, 1
  %v76 = vmul.f32 %v68, %v72
  %v77 = vmul.f32 %v67, %v73
  %78 = vst [vmem:[#allocation2 + $0x20] sm:$0xff] %v76
  %79 = vst [vmem:[#allocation2 + $0x28] sm:$0xff] %v77
  %80 = vrot.lane.b32.xlu0 %v23, 14
  %v81 = vpop.permute.xlu0 %80
  %82 = vrot.lane.b32.xlu0 %v24, 14
  %v83 = vpop.permute.xlu0 %82
  %vm84 = vcmp.lt.s32.totalorder %v30, 14
  %v85 = vsel %vm84, %v81, %v83
  %v86 = vsel %vm84, %v83, %v81
  %s87 = scalar_lea.vmem %s5, 3
  %v88 = vld [vmem:[%s87] ss:$8 sm:$0x3]
  %v90 = vperm.slane %v88, 0
  %v91 = vperm.slane %v88, 1
  %v94 = vmul.f32 %v86, %v90
  %v95 = vmul.f32 %v85, %v91
  %96 = vst [vmem:[#allocation2 + $0x30] sm:$0xff] %v94
  %97 = vst [vmem:[#allocation2 + $0x38] sm:$0xff] %v95
  %98 = vrot.lane.b32.xlu0 %v23, 1
  %v99 = vpop.permute.xlu0 %98
  %100 = vrot.lane.b32.xlu0 %v24, 1
  %v101 = vpop.permute.xlu0 %100
  %vm102 = vcmp.lt.s32.totalorder %v30, 1
  %v103 = vsel %vm102, %v99, %v101
  %v104 = vsel %vm102, %v101, %v99
  %s105 = scalar_lea.vmem %s5, 4
  %v106 = vld [vmem:[%s105] ss:$8 sm:$0x3]
  %v108 = vperm.slane %v106, 0
  %v109 = vperm.slane %v106, 1
  %v112 = vmul.f32 %v104, %v108
  %v113 = vmul.f32 %v103, %v109
  %114 = vst [vmem:[#allocation2 + $0x40] sm:$0xff] %v112
  %115 = vst [vmem:[#allocation2 + $0x48] sm:$0xff] %v113
  %116 = vst [vmem:[#allocation2 + $0x50] sm:$0xff] %v23
  %117 = vst [vmem:[#allocation2 + $0x58] sm:$0xff] %v24
  %118 = vrot.lane.b32.xlu0 %v23, 127
  %v119 = vpop.permute.xlu0 %118
  %120 = vrot.lane.b32.xlu0 %v24, 127
  %v121 = vpop.permute.xlu0 %120
  %vm122 = vcmp.lt.s32.totalorder %v30, 127
  %v123 = vsel %vm122, %v119, %v121
  %v124 = vsel %vm122, %v121, %v119
  %s125 = scalar_lea.vmem %s5, 6
  %v126 = vld [vmem:[%s125] ss:$8 sm:$0x3]
  %v128 = vperm.slane %v126, 0
  %v129 = vperm.slane %v126, 1
  %v132 = vmul.f32 %v123, %v128
  %v133 = vmul.f32 %v124, %v129
  %134 = vst [vmem:[#allocation2 + $0x60] sm:$0xff] %v132
  %135 = vst [vmem:[#allocation2 + $0x68] sm:$0xff] %v133
  %136 = vrot.lane.b32.xlu0 %v23, 126
  %v137 = vpop.permute.xlu0 %136
  %138 = vrot.lane.b32.xlu0 %v24, 126
  %v139 = vpop.permute.xlu0 %138
  %vm140 = vcmp.lt.s32.totalorder %v30, 126
  %v141 = vsel %vm140, %v137, %v139
  %v142 = vsel %vm140, %v139, %v137
  %s143 = scalar_lea.vmem %s5, 7
  %v144 = vld [vmem:[%s143] ss:$8 sm:$0x3]
  %v146 = vperm.slane %v144, 0
  %v147 = vperm.slane %v144, 1
  %v150 = vmul.f32 %v141, %v146
  %v151 = vmul.f32 %v142, %v147
  %152 = vst [vmem:[#allocation2 + $0x70] sm:$0xff] %v150
  %153 = vst [vmem:[#allocation2 + $0x78] sm:$0xff] %v151
  %154 = vrot.lane.b32.xlu0 %v23, 113
  %v155 = vpop.permute.xlu0 %154
  %156 = vrot.lane.b32.xlu0 %v24, 113
  %v157 = vpop.permute.xlu0 %156
  %vm158 = vcmp.lt.s32.totalorder %v30, 113
  %v159 = vsel %vm158, %v155, %v157
  %v160 = vsel %vm158, %v157, %v155
  %s161 = scalar_lea.vmem %s5, 16
  %v162 = vld [vmem:[%s161] ss:$8 sm:$0x3]
  %v164 = vperm.slane %v162, 0
  %v165 = vperm.slane %v162, 1
  %v168 = vmul.f32 %v159, %v164
  %v169 = vmul.f32 %v160, %v165
  %170 = vst [vmem:[#allocation2 + $0x80] sm:$0xff] %v168
  %171 = vst [vmem:[#allocation2 + $0x88] sm:$0xff] %v169
  %172 = vrot.lane.b32.xlu0 %v23, 112
  %v173 = vpop.permute.xlu0 %172
  %174 = vrot.lane.b32.xlu0 %v24, 112
  %v175 = vpop.permute.xlu0 %174
  %vm176 = vcmp.lt.s32.totalorder %v30, 112
  %v177 = vsel %vm176, %v173, %v175
  %v178 = vsel %vm176, %v175, %v173
  %s179 = scalar_lea.vmem %s5, 17
  %v180 = vld [vmem:[%s179] ss:$8 sm:$0x3]
  %v182 = vperm.slane %v180, 0
  %v183 = vperm.slane %v180, 1
  %v186 = vmul.f32 %v177, %v182
  %v187 = vmul.f32 %v178, %v183
  %188 = vst [vmem:[#allocation2 + $0x90] sm:$0xff] %v186
  %189 = vst [vmem:[#allocation2 + $0x98] sm:$0xff] %v187
  %190 = vrot.lane.b32.xlu0 %v23, 111
  %v191 = vpop.permute.xlu0 %190
  %192 = vrot.lane.b32.xlu0 %v24, 111
  %v193 = vpop.permute.xlu0 %192
  %vm194 = vcmp.lt.s32.totalorder %v30, 111
  %v195 = vsel %vm194, %v191, %v193
  %v196 = vsel %vm194, %v193, %v191
  %s197 = scalar_lea.vmem %s5, 18
  %v198 = vld [vmem:[%s197] ss:$8 sm:$0x3]
  %v200 = vperm.slane %v198, 0
  %v201 = vperm.slane %v198, 1
  %v204 = vmul.f32 %v195, %v200
  %v205 = vmul.f32 %v196, %v201
  %206 = vst [vmem:[#allocation2 + $0xa0] sm:$0xff] %v204
  %207 = vst [vmem:[#allocation2 + $0xa8] sm:$0xff] %v205
  %208 = vrot.lane.b32.xlu0 %v23, 110
  %v209 = vpop.permute.xlu0 %208
  %210 = vrot.lane.b32.xlu0 %v24, 110
  %v211 = vpop.permute.xlu0 %210
  %vm212 = vcmp.lt.s32.totalorder %v30, 110
  %v213 = vsel %vm212, %v209, %v211
  %v214 = vsel %vm212, %v211, %v209
  %s215 = scalar_lea.vmem %s5, 19
  %v216 = vld [vmem:[%s215] ss:$8 sm:$0x3]
  %v218 = vperm.slane %v216, 0
  %v219 = vperm.slane %v216, 1
  %v222 = vmul.f32 %v213, %v218
  %v223 = vmul.f32 %v214, %v219
  %224 = vst [vmem:[#allocation2 + $0xb0] sm:$0xff] %v222
  %225 = vst [vmem:[#allocation2 + $0xb8] sm:$0xff] %v223
  %226 = vrot.lane.b32.xlu0 %v23, 97
  %v227 = vpop.permute.xlu0 %226
  %228 = vrot.lane.b32.xlu0 %v24, 97
  %v229 = vpop.permute.xlu0 %228
  %vm230 = vcmp.lt.s32.totalorder %v30, 97
  %v231 = vsel %vm230, %v227, %v229
  %v232 = vsel %vm230, %v229, %v227
  %s233 = scalar_lea.vmem %s5, 20
  %v234 = vld [vmem:[%s233] ss:$8 sm:$0x3]
  %v236 = vperm.slane %v234, 0
  %v237 = vperm.slane %v234, 1
  %v240 = vmul.f32 %v231, %v236
  %v241 = vmul.f32 %v232, %v237
  %242 = vst [vmem:[#allocation2 + $0xc0] sm:$0xff] %v240
  %243 = vst [vmem:[#allocation2 + $0xc8] sm:$0xff] %v241
  %244 = vrot.lane.b32.xlu0 %v23, 96
  %v245 = vpop.permute.xlu0 %244
  %246 = vrot.lane.b32.xlu0 %v24, 96
  %v247 = vpop.permute.xlu0 %246
  %vm248 = vcmp.lt.s32.totalorder %v30, 96
  %v249 = vsel %vm248, %v245, %v247
  %v250 = vsel %vm248, %v247, %v245
  %s251 = scalar_lea.vmem %s5, 21
  %v252 = vld [vmem:[%s251] ss:$8 sm:$0x3]
  %v254 = vperm.slane %v252, 0
  %v255 = vperm.slane %v252, 1
  %v258 = vmul.f32 %v249, %v254
  %v259 = vmul.f32 %v250, %v255
  %260 = vst [vmem:[#allocation2 + $0xd0] sm:$0xff] %v258
  %261 = vst [vmem:[#allocation2 + $0xd8] sm:$0xff] %v259
  %262 = vrot.lane.b32.xlu0 %v23, 95
  %v263 = vpop.permute.xlu0 %262
  %264 = vrot.lane.b32.xlu0 %v24, 95
  %v265 = vpop.permute.xlu0 %264
  %vm266 = vcmp.lt.s32.totalorder %v30, 95
  %v267 = vsel %vm266, %v263, %v265
  %v268 = vsel %vm266, %v265, %v263
  %s269 = scalar_lea.vmem %s5, 22
  %v270 = vld [vmem:[%s269] ss:$8 sm:$0x3]
  %v272 = vperm.slane %v270, 0
  %v273 = vperm.slane %v270, 1
  %v276 = vmul.f32 %v267, %v272
  %v277 = vmul.f32 %v268, %v273
  %278 = vst [vmem:[#allocation2 + $0xe0] sm:$0xff] %v276
  %279 = vst [vmem:[#allocation2 + $0xe8] sm:$0xff] %v277
  %280 = vrot.lane.b32.xlu0 %v23, 94
  %v281 = vpop.permute.xlu0 %280
  %282 = vrot.lane.b32.xlu0 %v24, 94
  %v283 = vpop.permute.xlu0 %282
  %vm284 = vcmp.lt.s32.totalorder %v30, 94
  %v285 = vsel %vm284, %v281, %v283
  %v286 = vsel %vm284, %v283, %v281
  %s287 = scalar_lea.vmem %s5, 23
  %v288 = vld [vmem:[%s287] ss:$8 sm:$0x3]
  %v290 = vperm.slane %v288, 0
  %v291 = vperm.slane %v288, 1
  %v294 = vmul.f32 %v285, %v290
  %v295 = vmul.f32 %v286, %v291
  %296 = vst [vmem:[#allocation2 + $0xf0] sm:$0xff] %v294
  %297 = vst [vmem:[#allocation2 + $0xf8] sm:$0xff] %v295
  %v298 = vld [vmem:[%s1] sm:$0xff]
  %v299 = vld [vmem:[#allocation2] sm:$0xff]
  %v300 = vld [vmem:[#allocation2 + $0x8] sm:$0xff]
  %v301 = vld [vmem:[#allocation2 + $0x10] sm:$0xff]
  %v302 = vld [vmem:[#allocation2 + $0x18] sm:$0xff]
  %v303 = vld [vmem:[#allocation2 + $0x20] sm:$0xff]
  %v304 = vld [vmem:[#allocation2 + $0x28] sm:$0xff]
  %v305 = vld [vmem:[#allocation2 + $0x30] sm:$0xff]
  %v306 = vld [vmem:[#allocation2 + $0x38] sm:$0xff]
  %v307 = vld [vmem:[#allocation2 + $0x40] sm:$0xff]
  %v308 = vld [vmem:[#allocation2 + $0x48] sm:$0xff]
  %v309 = vld [vmem:[#allocation2 + $0x50] sm:$0xff]
  %v310 = vld [vmem:[#allocation2 + $0x58] sm:$0xff]
  %v311 = vld [vmem:[#allocation2 + $0x60] sm:$0xff]
  %v312 = vld [vmem:[#allocation2 + $0x68] sm:$0xff]
  %v313 = vld [vmem:[#allocation2 + $0x70] sm:$0xff]
  %v314 = vld [vmem:[#allocation2 + $0x78] sm:$0xff]
  %v315 = vld [vmem:[#allocation2 + $0x80] sm:$0xff]
  %v316 = vld [vmem:[#allocation2 + $0x88] sm:$0xff]
  %v317 = vld [vmem:[#allocation2 + $0x90] sm:$0xff]
  %v318 = vld [vmem:[#allocation2 + $0x98] sm:$0xff]
  %v319 = vld [vmem:[#allocation2 + $0xa0] sm:$0xff]
  %v320 = vld [vmem:[#allocation2 + $0xa8] sm:$0xff]
  %v321 = vld [vmem:[#allocation2 + $0xb0] sm:$0xff]
  %v322 = vld [vmem:[#allocation2 + $0xb8] sm:$0xff]
  %v323 = vld [vmem:[#allocation2 + $0xc0] sm:$0xff]
  %v324 = vld [vmem:[#allocation2 + $0xc8] sm:$0xff]
  %v325 = vld [vmem:[#allocation2 + $0xd0] sm:$0xff]
  %v326 = vld [vmem:[#allocation2 + $0xd8] sm:$0xff]
  %v327 = vld [vmem:[#allocation2 + $0xe0] sm:$0xff]
  %v328 = vld [vmem:[#allocation2 + $0xe8] sm:$0xff]
  %v329 = vld [vmem:[#allocation2 + $0xf0] sm:$0xff]
  %v330 = vld [vmem:[#allocation2 + $0xf8] sm:$0xff]
  %v331 = vld [vmem:[%s2] sm:$0xff]
  %333 = vset.pattern.permute.xlu0 0
  %334 = vperm.xlu0 %333, %v331
  %v335 = vpop.permute.xlu0 %334
  %337 = vmatpush.msra.mxu0 %v329
  %338 = vmatpush.msra.mxu0 %v327
  %339 = vmatpush.msra.mxu0 %v325
  %340 = vmatpush.msra.mxu0 %v323
  %341 = vmatpush.msra.mxu0 %v321
  %342 = vmatpush.msra.mxu0 %v319
  %343 = vmatpush.msra.mxu0 %v317
  %344 = vmatpush.msra.mxu0 %v315
  %345 = vmatpush.msra.mxu0 %v313
  %346 = vmatpush.msra.mxu0 %v311
  %347 = vmatpush.msra.mxu0 %v309
  %348 = vmatpush.msra.mxu0 %v307
  %349 = vmatpush.msra.mxu0 %v305
  %350 = vmatpush.msra.mxu0 %v303
  %351 = vmatpush.msra.mxu0 %v301
  %352 = vmatpush.msra.mxu0 %v299
  %353 = vmatmul.f32.gmra.mxu0 %v298
  %v354 = vpop.f32.mrf.mxu0
  %v355 = vadd.f32 %v335, %v354
  %356 = vdwg.mxu0
  %357 = vmatpush.msra.mxu0 %v330
  %358 = vmatpush.msra.mxu0 %v328
  %359 = vmatpush.msra.mxu0 %v326
  %360 = vmatpush.msra.mxu0 %v324
  %361 = vmatpush.msra.mxu0 %v322
  %362 = vmatpush.msra.mxu0 %v320
  %363 = vmatpush.msra.mxu0 %v318
  %364 = vmatpush.msra.mxu0 %v316
  %365 = vmatpush.msra.mxu0 %v314
  %366 = vmatpush.msra.mxu0 %v312
  %367 = vmatpush.msra.mxu0 %v310
  %368 = vmatpush.msra.mxu0 %v308
  %369 = vmatpush.msra.mxu0 %v306
  %370 = vmatpush.msra.mxu0 %v304
  %371 = vmatpush.msra.mxu0 %v302
  %372 = vmatpush.msra.mxu0 %v300
  %373 = vmatmul.f32.gmra.mxu0 %v298
  %v374 = vpop.f32.mrf.mxu0
  %v375 = vadd.f32 %v335, %v374
  %376 = vdwg.mxu0
  %v377 = vmax.f32 %v355, 0.0
  %v378 = vmax.f32 %v375, 0.0
  %379 = vrot.lane.b32.xlu0 %v377, 17
  %v380 = vpop.permute.xlu0 %379
  %381 = vrot.lane.b32.xlu0 %v378, 17
  %v382 = vpop.permute.xlu0 %381
  %v383 = vsel %vm31, %v380, %v382
  %v384 = vsel %vm31, %v382, %v380
  %v385 = vld [vmem:[%s5] ss:$8 sm:$0x3]
  %v387 = vperm.slane %v385, 0
  %v388 = vperm.slane %v385, 1
  %v391 = vmul.f32 %v384, %v387
  %v392 = vmul.f32 %v383, %v388
  %393 = vst [vmem:[#allocation2] sm:$0xff] %v391
  %394 = vst [vmem:[#allocation2 + $0x8] sm:$0xff] %v392
  %395 = vrot.lane.b32.xlu0 %v377, 16
  %v396 = vpop.permute.xlu0 %395
  %397 = vrot.lane.b32.xlu0 %v378, 16
  %v398 = vpop.permute.xlu0 %397
  %v399 = vsel %vm48, %v396, %v398
  %v400 = vsel %vm48, %v398, %v396
  %v401 = vld [vmem:[%s51] ss:$8 sm:$0x3]
  %v403 = vperm.slane %v401, 0
  %v404 = vperm.slane %v401, 1
  %v407 = vmul.f32 %v400, %v403
  %v408 = vmul.f32 %v399, %v404
  %409 = vst [vmem:[#allocation2 + $0x10] sm:$0xff] %v407
  %410 = vst [vmem:[#allocation2 + $0x18] sm:$0xff] %v408
  %411 = vrot.lane.b32.xlu0 %v377, 15
  %v412 = vpop.permute.xlu0 %411
  %413 = vrot.lane.b32.xlu0 %v378, 15
  %v414 = vpop.permute.xlu0 %413
  %v415 = vsel %vm66, %v412, %v414
  %v416 = vsel %vm66, %v414, %v412
  %v417 = vld [vmem:[%s69] ss:$8 sm:$0x3]
  %v419 = vperm.slane %v417, 0
  %v420 = vperm.slane %v417, 1
  %v423 = vmul.f32 %v416, %v419
  %v424 = vmul.f32 %v415, %v420
  %425 = vst [vmem:[#allocation2 + $0x20] sm:$0xff] %v423
  %426 = vst [vmem:[#allocation2 + $0x28] sm:$0xff] %v424
  %427 = vrot.lane.b32.xlu0 %v377, 14
  %v428 = vpop.permute.xlu0 %427
  %429 = vrot.lane.b32.xlu0 %v378, 14
  %v430 = vpop.permute.xlu0 %429
  %v431 = vsel %vm84, %v428, %v430
  %v432 = vsel %vm84, %v430, %v428
  %v433 = vld [vmem:[%s87] ss:$8 sm:$0x3]
  %v435 = vperm.slane %v433, 0
  %v436 = vperm.slane %v433, 1
  %v439 = vmul.f32 %v432, %v435
  %v440 = vmul.f32 %v431, %v436
  %441 = vst [vmem:[#allocation2 + $0x30] sm:$0xff] %v439
  %442 = vst [vmem:[#allocation2 + $0x38] sm:$0xff] %v440
  %443 = vrot.lane.b32.xlu0 %v377, 1
  %v444 = vpop.permute.xlu0 %443
  %445 = vrot.lane.b32.xlu0 %v378, 1
  %v446 = vpop.permute.xlu0 %445
  %v447 = vsel %vm102, %v444, %v446
  %v448 = vsel %vm102, %v446, %v444
  %v449 = vld [vmem:[%s105] ss:$8 sm:$0x3]
  %v451 = vperm.slane %v449, 0
  %v452 = vperm.slane %v449, 1
  %v455 = vmul.f32 %v448, %v451
  %v456 = vmul.f32 %v447, %v452
  %457 = vst [vmem:[#allocation2 + $0x40] sm:$0xff] %v455
  %458 = vst [vmem:[#allocation2 + $0x48] sm:$0xff] %v456
  %459 = vst [vmem:[#allocation2 + $0x50] sm:$0xff] %v377
  %460 = vst [vmem:[#allocation2 + $0x58] sm:$0xff] %v378
  %461 = vrot.lane.b32.xlu0 %v377, 127
  %v462 = vpop.permute.xlu0 %461
  %463 = vrot.lane.b32.xlu0 %v378, 127
  %v464 = vpop.permute.xlu0 %463
  %v465 = vsel %vm122, %v462, %v464
  %v466 = vsel %vm122, %v464, %v462
  %v467 = vld [vmem:[%s125] ss:$8 sm:$0x3]
  %v469 = vperm.slane %v467, 0
  %v470 = vperm.slane %v467, 1
  %v473 = vmul.f32 %v465, %v469
  %v474 = vmul.f32 %v466, %v470
  %475 = vst [vmem:[#allocation2 + $0x60] sm:$0xff] %v473
  %476 = vst [vmem:[#allocation2 + $0x68] sm:$0xff] %v474
  %477 = vrot.lane.b32.xlu0 %v377, 126
  %v478 = vpop.permute.xlu0 %477
  %479 = vrot.lane.b32.xlu0 %v378, 126
  %v480 = vpop.permute.xlu0 %479
  %v481 = vsel %vm140, %v478, %v480
  %v482 = vsel %vm140, %v480, %v478
  %v483 = vld [vmem:[%s143] ss:$8 sm:$0x3]
  %v485 = vperm.slane %v483, 0
  %v486 = vperm.slane %v483, 1
  %v489 = vmul.f32 %v481, %v485
  %v490 = vmul.f32 %v482, %v486
  %491 = vst [vmem:[#allocation2 + $0x70] sm:$0xff] %v489
  %492 = vst [vmem:[#allocation2 + $0x78] sm:$0xff] %v490
  %493 = vrot.lane.b32.xlu0 %v377, 113
  %v494 = vpop.permute.xlu0 %493
  %495 = vrot.lane.b32.xlu0 %v378, 113
  %v496 = vpop.permute.xlu0 %495
  %v497 = vsel %vm158, %v494, %v496
  %v498 = vsel %vm158, %v496, %v494
  %v499 = vld [vmem:[%s161] ss:$8 sm:$0x3]
  %v501 = vperm.slane %v499, 0
  %v502 = vperm.slane %v499, 1
  %v505 = vmul.f32 %v497, %v501
  %v506 = vmul.f32 %v498, %v502
  %507 = vst [vmem:[#allocation2 + $0x80] sm:$0xff] %v505
  %508 = vst [vmem:[#allocation2 + $0x88] sm:$0xff] %v506
  %509 = vrot.lane.b32.xlu0 %v377, 112
  %v510 = vpop.permute.xlu0 %509
  %511 = vrot.lane.b32.xlu0 %v378, 112
  %v512 = vpop.permute.xlu0 %511
  %v513 = vsel %vm176, %v510, %v512
  %v514 = vsel %vm176, %v512, %v510
  %v515 = vld [vmem:[%s179] ss:$8 sm:$0x3]
  %v517 = vperm.slane %v515, 0
  %v518 = vperm.slane %v515, 1
  %v521 = vmul.f32 %v513, %v517
  %v522 = vmul.f32 %v514, %v518
  %523 = vst [vmem:[#allocation2 + $0x90] sm:$0xff] %v521
  %524 = vst [vmem:[#allocation2 + $0x98] sm:$0xff] %v522
  %525 = vrot.lane.b32.xlu0 %v377, 111
  %v526 = vpop.permute.xlu0 %525
  %527 = vrot.lane.b32.xlu0 %v378, 111
  %v528 = vpop.permute.xlu0 %527
  %v529 = vsel %vm194, %v526, %v528
  %v530 = vsel %vm194, %v528, %v526
  %v531 = vld [vmem:[%s197] ss:$8 sm:$0x3]
  %v533 = vperm.slane %v531, 0
  %v534 = vperm.slane %v531, 1
  %v537 = vmul.f32 %v529, %v533
  %v538 = vmul.f32 %v530, %v534
  %539 = vst [vmem:[#allocation2 + $0xa0] sm:$0xff] %v537
  %540 = vst [vmem:[#allocation2 + $0xa8] sm:$0xff] %v538
  %541 = vrot.lane.b32.xlu0 %v377, 110
  %v542 = vpop.permute.xlu0 %541
  %543 = vrot.lane.b32.xlu0 %v378, 110
  %v544 = vpop.permute.xlu0 %543
  %v545 = vsel %vm212, %v542, %v544
  %v546 = vsel %vm212, %v544, %v542
  %v547 = vld [vmem:[%s215] ss:$8 sm:$0x3]
  %v549 = vperm.slane %v547, 0
  %v550 = vperm.slane %v547, 1
  %v553 = vmul.f32 %v545, %v549
  %v554 = vmul.f32 %v546, %v550
  %555 = vst [vmem:[#allocation2 + $0xb0] sm:$0xff] %v553
  %556 = vst [vmem:[#allocation2 + $0xb8] sm:$0xff] %v554
  %557 = vrot.lane.b32.xlu0 %v377, 97
  %v558 = vpop.permute.xlu0 %557
  %559 = vrot.lane.b32.xlu0 %v378, 97
  %v560 = vpop.permute.xlu0 %559
  %v561 = vsel %vm230, %v558, %v560
  %v562 = vsel %vm230, %v560, %v558
  %v563 = vld [vmem:[%s233] ss:$8 sm:$0x3]
  %v565 = vperm.slane %v563, 0
  %v566 = vperm.slane %v563, 1
  %v569 = vmul.f32 %v561, %v565
  %v570 = vmul.f32 %v562, %v566
  %571 = vst [vmem:[#allocation2 + $0xc0] sm:$0xff] %v569
  %572 = vst [vmem:[#allocation2 + $0xc8] sm:$0xff] %v570
  %573 = vrot.lane.b32.xlu0 %v377, 96
  %v574 = vpop.permute.xlu0 %573
  %575 = vrot.lane.b32.xlu0 %v378, 96
  %v576 = vpop.permute.xlu0 %575
  %v577 = vsel %vm248, %v574, %v576
  %v578 = vsel %vm248, %v576, %v574
  %v579 = vld [vmem:[%s251] ss:$8 sm:$0x3]
  %v581 = vperm.slane %v579, 0
  %v582 = vperm.slane %v579, 1
  %v585 = vmul.f32 %v577, %v581
  %v586 = vmul.f32 %v578, %v582
  %587 = vst [vmem:[#allocation2 + $0xd0] sm:$0xff] %v585
  %588 = vst [vmem:[#allocation2 + $0xd8] sm:$0xff] %v586
  %589 = vrot.lane.b32.xlu0 %v377, 95
  %v590 = vpop.permute.xlu0 %589
  %591 = vrot.lane.b32.xlu0 %v378, 95
  %v592 = vpop.permute.xlu0 %591
  %v593 = vsel %vm266, %v590, %v592
  %v594 = vsel %vm266, %v592, %v590
  %v595 = vld [vmem:[%s269] ss:$8 sm:$0x3]
  %v597 = vperm.slane %v595, 0
  %v598 = vperm.slane %v595, 1
  %v601 = vmul.f32 %v593, %v597
  %v602 = vmul.f32 %v594, %v598
  %603 = vst [vmem:[#allocation2 + $0xe0] sm:$0xff] %v601
  %604 = vst [vmem:[#allocation2 + $0xe8] sm:$0xff] %v602
  %605 = vrot.lane.b32.xlu0 %v377, 94
  %v606 = vpop.permute.xlu0 %605
  %607 = vrot.lane.b32.xlu0 %v378, 94
  %v608 = vpop.permute.xlu0 %607
  %v609 = vsel %vm284, %v606, %v608
  %v610 = vsel %vm284, %v608, %v606
  %v611 = vld [vmem:[%s287] ss:$8 sm:$0x3]
  %v613 = vperm.slane %v611, 0
  %v614 = vperm.slane %v611, 1
  %v617 = vmul.f32 %v609, %v613
  %v618 = vmul.f32 %v610, %v614
  %619 = vst [vmem:[#allocation2 + $0xf0] sm:$0xff] %v617
  %620 = vst [vmem:[#allocation2 + $0xf8] sm:$0xff] %v618
  %v621 = vld [vmem:[%s3] sm:$0xff]
  %v622 = vld [vmem:[#allocation2] sm:$0xff]
  %v623 = vld [vmem:[#allocation2 + $0x8] sm:$0xff]
  %v624 = vld [vmem:[#allocation2 + $0x10] sm:$0xff]
  %v625 = vld [vmem:[#allocation2 + $0x18] sm:$0xff]
  %v626 = vld [vmem:[#allocation2 + $0x20] sm:$0xff]
  %v627 = vld [vmem:[#allocation2 + $0x28] sm:$0xff]
  %v628 = vld [vmem:[#allocation2 + $0x30] sm:$0xff]
  %v629 = vld [vmem:[#allocation2 + $0x38] sm:$0xff]
  %v630 = vld [vmem:[#allocation2 + $0x40] sm:$0xff]
  %v631 = vld [vmem:[#allocation2 + $0x48] sm:$0xff]
  %v632 = vld [vmem:[#allocation2 + $0x50] sm:$0xff]
  %v633 = vld [vmem:[#allocation2 + $0x58] sm:$0xff]
  %v634 = vld [vmem:[#allocation2 + $0x60] sm:$0xff]
  %v635 = vld [vmem:[#allocation2 + $0x68] sm:$0xff]
  %v636 = vld [vmem:[#allocation2 + $0x70] sm:$0xff]
  %v637 = vld [vmem:[#allocation2 + $0x78] sm:$0xff]
  %v638 = vld [vmem:[#allocation2 + $0x80] sm:$0xff]
  %v639 = vld [vmem:[#allocation2 + $0x88] sm:$0xff]
  %v640 = vld [vmem:[#allocation2 + $0x90] sm:$0xff]
  %v641 = vld [vmem:[#allocation2 + $0x98] sm:$0xff]
  %v642 = vld [vmem:[#allocation2 + $0xa0] sm:$0xff]
  %v643 = vld [vmem:[#allocation2 + $0xa8] sm:$0xff]
  %v644 = vld [vmem:[#allocation2 + $0xb0] sm:$0xff]
  %v645 = vld [vmem:[#allocation2 + $0xb8] sm:$0xff]
  %v646 = vld [vmem:[#allocation2 + $0xc0] sm:$0xff]
  %v647 = vld [vmem:[#allocation2 + $0xc8] sm:$0xff]
  %v648 = vld [vmem:[#allocation2 + $0xd0] sm:$0xff]
  %v649 = vld [vmem:[#allocation2 + $0xd8] sm:$0xff]
  %v650 = vld [vmem:[#allocation2 + $0xe0] sm:$0xff]
  %v651 = vld [vmem:[#allocation2 + $0xe8] sm:$0xff]
  %v652 = vld [vmem:[#allocation2 + $0xf0] sm:$0xff]
  %v653 = vld [vmem:[#allocation2 + $0xf8] sm:$0xff]
  %v654 = vld [vmem:[%s4] sm:$0xff]
  %656 = vset.pattern.permute.xlu0 0
  %657 = vperm.xlu0 %656, %v654
  %v658 = vpop.permute.xlu0 %657
  %660 = vmatpush.msra.mxu0 %v652
  %661 = vmatpush.msra.mxu0 %v650
  %662 = vmatpush.msra.mxu0 %v648
  %663 = vmatpush.msra.mxu0 %v646
  %664 = vmatpush.msra.mxu0 %v644
  %665 = vmatpush.msra.mxu0 %v642
  %666 = vmatpush.msra.mxu0 %v640
  %667 = vmatpush.msra.mxu0 %v638
  %668 = vmatpush.msra.mxu0 %v636
  %669 = vmatpush.msra.mxu0 %v634
  %670 = vmatpush.msra.mxu0 %v632
  %671 = vmatpush.msra.mxu0 %v630
  %672 = vmatpush.msra.mxu0 %v628
  %673 = vmatpush.msra.mxu0 %v626
  %674 = vmatpush.msra.mxu0 %v624
  %675 = vmatpush.msra.mxu0 %v622
  %676 = vmatmul.f32.gmra.mxu0 %v621
  %v677 = vpop.f32.mrf.mxu0
  %v678 = vadd.f32 %v658, %v677
  %679 = vdwg.mxu0
  %680 = vmatpush.msra.mxu0 %v653
  %681 = vmatpush.msra.mxu0 %v651
  %682 = vmatpush.msra.mxu0 %v649
  %683 = vmatpush.msra.mxu0 %v647
  %684 = vmatpush.msra.mxu0 %v645
  %685 = vmatpush.msra.mxu0 %v643
  %686 = vmatpush.msra.mxu0 %v641
  %687 = vmatpush.msra.mxu0 %v639
  %688 = vmatpush.msra.mxu0 %v637
  %689 = vmatpush.msra.mxu0 %v635
  %690 = vmatpush.msra.mxu0 %v633
  %691 = vmatpush.msra.mxu0 %v631
  %692 = vmatpush.msra.mxu0 %v629
  %693 = vmatpush.msra.mxu0 %v627
  %694 = vmatpush.msra.mxu0 %v625
  %695 = vmatpush.msra.mxu0 %v623
  %696 = vmatmul.f32.gmra.mxu0 %v621
  %v697 = vpop.f32.mrf.mxu0
  %v698 = vadd.f32 %v658, %v697
  %699 = vdwg.mxu0
  %v700 = vadd.f32 %v678, %v23
  %v701 = vadd.f32 %v698, %v24
  %702 = vst [vmem:[%s6] sm:$0xff] %v700
  %703 = vst [vmem:[%s6 + $0x8] sm:$0xff] %v701
  // Predicated region
  $region26: #{resblock_pallas.1} parent=0 // pred_check
    _
  $region27: #{resblock_pallas.1} parent=0 // pred_check_branch
    %705 = sbr.rel (0) target = $region29
  $region28: #{resblock_pallas.1} parent=0 // pred_region
    _
  $region29: #{resblock_pallas.1} parent=0 // pred_fallthru
    _
  // Predicated region
  $region30: #{resblock_pallas.1} parent=0 // pred_check
    _
  $region31: #{resblock_pallas.1} parent=0 // pred_check_branch
    %707 = sbr.rel (0) target = $region33
  $region32: #{resblock_pallas.1} parent=0 // pred_region
    _
  $region33: #{resblock_pallas.1} parent=0 // pred_fallthru
    _

</llo_original>
